<compile_context>
chip_gen: v6e
topology: v6e:2x2x1
jax: 0.10.0
libtpu: 0.0.40
codegen_flags: <defaults>
</compile_context>

<pallas_src>
import functools

import jax
import jax.numpy as jnp
from jax.experimental import pallas as pl
from jax.experimental.pallas import tpu as pltpu

LANE = 128  # TPU lane width; lane-dense output slab width


# ----------------------------------------------------------------------------
# Fused critic kernel
# ----------------------------------------------------------------------------
def _apply_act(y, activation):
    if activation == "relu":
        return jnp.maximum(y, 0.0)
    if activation == "sigmoid":
        return jax.nn.sigmoid(y)
    if activation == "tanh":
        return jnp.tanh(y)
    raise ValueError(f"unknown activation {activation!r}")


def _fused_critic_kernel(x_ref, a_ref, *refs, num_hidden, activation,
                         inv_max_action):
    # refs = [w0x, w0a, b0, (w1, b1), ..., wq_row, bq, o_ref]
    o_ref = refs[-1]
    w0x, w0a, b0 = refs[0], refs[1], refs[2]

    # action normalisation: free VPU op inside the kernel
    a_norm = a_ref[...] * inv_max_action

    # first hidden layer as two partial dots (replaces concat + single dot)
    h = (jnp.dot(x_ref[...], w0x[...], preferred_element_type=jnp.float32)
         + jnp.dot(a_norm, w0a[...], preferred_element_type=jnp.float32)
         + b0[...])
    h = _apply_act(h, activation)

    # remaining hidden layers, intermediates stay in vregs
    idx = 3
    for _ in range(num_hidden - 1):
        w, b = refs[idx], refs[idx + 1]
        idx += 2
        h = jnp.dot(h, w[...], preferred_element_type=jnp.float32) + b[...]
        h = _apply_act(h, activation)

    # q head: 1-column matmul -> VPU multiply + XLU lane reduction
    wq_row, bq = refs[idx], refs[idx + 1]            # (1, H_last), (1, 1)
    q = jnp.sum(h * wq_row[...], axis=-1, keepdims=True) + bq[...]  # (TB, 1)

    # lane-dense store (unmasked vst); wrapper slices column 0
    o_ref[...] = jnp.broadcast_to(q, o_ref.shape).astype(o_ref.dtype)


# ----------------------------------------------------------------------------
# Wrapper
# ----------------------------------------------------------------------------
def critic_forward(params, x, actions, max_action, activation="relu"):
    B, din_xg = x.shape
    _, din_a = actions.shape
    layers = params["layers"]
    num_hidden = len(layers)
    assert num_hidden >= 1

    # batch tile: multiple of 8, capped at 128 rows per grid step
    TB = min(LANE, ((B + 7) // 8) * 8)
    B_pad = ((B + TB - 1) // TB) * TB
    if B_pad != B:
        pad = B_pad - B
        x = jnp.pad(x, ((0, pad), (0, 0)))
        actions = jnp.pad(actions, ((0, pad), (0, 0)))

    # split first weight into (obs+goal) and action parts; q weight as a row
    w0, b0 = layers[0]
    w0x, w0a = w0[:din_xg, :], w0[din_xg:, :]
    wq, bq = params["q_out"]
    wq_row = wq.T                                    # (1, H_last)

    weight_args = [w0x, w0a, b0]
    for w, b in layers[1:]:
        weight_args += [w, b]
    weight_args += [wq_row, bq]

    kernel = functools.partial(
        _fused_critic_kernel,
        num_hidden=num_hidden,
        activation=activation,
        inv_max_action=float(1.0 / max_action),
    )

    def batch_spec(arr):
        return pl.BlockSpec((TB, arr.shape[1]), lambda i: (i, 0))

    def resident_spec(arr):
        # same block every grid step -> stays VMEM-resident
        return pl.BlockSpec(arr.shape, lambda i: (0, 0))

    in_specs = [batch_spec(x), batch_spec(actions)]
    in_specs += [resident_spec(w) for w in weight_args]

    # advisory cost estimate
    dims = [din_xg + din_a] + [w.shape[1] for w, _ in layers]
    flops = 2 * B_pad * sum(a * b for a, b in zip(dims[:-1], dims[1:]))
    flops += 2 * B_pad * dims[-1]                    # q head
    transcendentals = 0 if activation == "relu" else B_pad * sum(dims[1:])
    param_bytes = sum(int(a.size) * a.dtype.itemsize for a in weight_args)
    bytes_accessed = 4 * (B_pad * (din_xg + din_a) + B_pad * LANE) + param_bytes

    q_pad = pl.pallas_call(
        kernel,
        out_shape=jax.ShapeDtypeStruct((B_pad, LANE), jnp.float32),
        grid=(B_pad // TB,),
        in_specs=in_specs,
        out_specs=pl.BlockSpec((TB, LANE), lambda i: (i, 0)),
        compiler_params=pltpu.CompilerParams(
            dimension_semantics=("parallel",)),
        cost_estimate=pl.CostEstimate(
            flops=flops,
            transcendentals=transcendentals,
            bytes_accessed=bytes_accessed),
    )(x, actions, *weight_args)

    return q_pad[:B, :1]

    # TODO(synk): cast x/W to bf16 at the kernel boundary (f32 accumulation)
    # once batches are large enough (>=128 rows) for the MXU to be the limiter.


# ----------------------------------------------------------------------------
# Parameters (torch.nn.Linear-style init) and pure-JAX reference
# ----------------------------------------------------------------------------
def init_critic_params(key, obs_dim, goal_dim, action_dim, hidden_dims):
    import math
    dims = [obs_dim + goal_dim + action_dim] + list(hidden_dims)
    params = {"layers": [], "q_out": None}
    for din, dout in zip(dims[:-1], dims[1:]):
        key, kw, kb = jax.random.split(key, 3)
        bound = 1.0 / math.sqrt(din)
        w = jax.random.uniform(kw, (din, dout), jnp.float32, -bound, bound)
        b = jax.random.uniform(kb, (1, dout), jnp.float32, -bound, bound)
        params["layers"].append((w, b))
    key, kw, kb = jax.random.split(key, 3)
    din = dims[-1]
    bound = 1.0 / math.sqrt(din)
    w = jax.random.uniform(kw, (din, 1), jnp.float32, -bound, bound)
    b = jax.random.uniform(kb, (1, 1), jnp.float32, -bound, bound)
    params["q_out"] = (w, b)
    return params


def critic_forward_ref(params, x, actions, max_action, activation="relu"):
    acts = {"relu": jax.nn.relu, "sigmoid": jax.nn.sigmoid, "tanh": jnp.tanh}
    h = jnp.concatenate([x, actions / max_action], axis=1)
    for w, b in params["layers"]:
        h = acts[activation](h @ w + b)
    w, b = params["q_out"]
    return h @ w + b


if __name__ == "__main__":
    # shapes consistent with the module: obs=10, goal=3, action=4 -> in=17,
    # hidden_dims=[32, 32], activation='relu', action_max=2.0
    batch = 8
    obs_dim, goal_dim, action_dim = 10, 3, 4
    hidden_dims = [32, 32]
    max_action = 2.0
    activation = "relu"

    key = jax.random.PRNGKey(0)
    kp, kx, ka = jax.random.split(key, 3)

    params = init_critic_params(kp, obs_dim, goal_dim, action_dim, hidden_dims)
    x = jax.random.normal(kx, (batch, obs_dim + goal_dim), jnp.float32)
    actions = jax.random.uniform(
        ka, (batch, action_dim), jnp.float32, -max_action, max_action)

    q = critic_forward(params, x, actions, max_action, activation)
    q = jax.block_until_ready(q)

    q_ref = critic_forward_ref(params, x, actions, max_action, activation)
    assert q.shape == (batch, 1)
    assert jnp.allclose(q, q_ref, atol=1e-5, rtol=1e-5), "mismatch vs reference"

    print("KERNEL_OK")
</pallas_src>

<mosaic_0001>
module attributes {stable_mosaic.version = 11 : i64} {
  func.func @_fused_critic_kernel(%arg0: i32, %arg1: memref<8x13xf32, #tpu.memory_space<vmem>>, %arg2: memref<8x4xf32, #tpu.memory_space<vmem>>, %arg3: memref<13x32xf32, #tpu.memory_space<vmem>>, %arg4: memref<4x32xf32, #tpu.memory_space<vmem>>, %arg5: memref<1x32xf32, #tpu.memory_space<vmem>>, %arg6: memref<32x32xf32, #tpu.memory_space<vmem>>, %arg7: memref<1x32xf32, #tpu.memory_space<vmem>>, %arg8: memref<1x32xf32, #tpu.memory_space<vmem>>, %arg9: memref<1x1xf32, #tpu.memory_space<vmem>>, %arg10: memref<8x128xf32, #tpu.memory_space<vmem>>) attributes {dimension_semantics = [#tpu.dimension_semantics<parallel>], iteration_bounds = array<i64: 1>, scalar_prefetch = 0 : i64, scratch_operands = 0 : i64, tpu.core_type = #tpu.core_type<tc>, window_params = [{transform_indices = @transform_0, window_bounds = array<i64: 8, 13>}, {transform_indices = @transform_1, window_bounds = array<i64: 8, 4>}, {pipeline_mode = #tpu.pipeline_mode<synchronous>, transform_indices = @transform_2, window_bounds = array<i64: 13, 32>}, {pipeline_mode = #tpu.pipeline_mode<synchronous>, transform_indices = @transform_3, window_bounds = array<i64: 4, 32>}, {pipeline_mode = #tpu.pipeline_mode<synchronous>, transform_indices = @transform_4, window_bounds = array<i64: 1, 32>}, {pipeline_mode = #tpu.pipeline_mode<synchronous>, transform_indices = @transform_5, window_bounds = array<i64: 32, 32>}, {pipeline_mode = #tpu.pipeline_mode<synchronous>, transform_indices = @transform_6, window_bounds = array<i64: 1, 32>}, {pipeline_mode = #tpu.pipeline_mode<synchronous>, transform_indices = @transform_7, window_bounds = array<i64: 1, 32>}, {pipeline_mode = #tpu.pipeline_mode<synchronous>, transform_indices = @transform_8, window_bounds = array<i64: 1, 1>}, {transform_indices = @transform_9, window_bounds = array<i64: 8, 128>}]} {
    %c0 = arith.constant 0 : index
    %c0_0 = arith.constant 0 : index
    %0 = vector.load %arg2[%c0, %c0_0] : memref<8x4xf32, #tpu.memory_space<vmem>>, vector<8x4xf32>
    %cst = arith.constant 5.000000e-01 : f32
    %1 = vector.broadcast %cst : f32 to vector<8x4xf32>
    %2 = arith.mulf %0, %1 : vector<8x4xf32>
    %c0_1 = arith.constant 0 : index
    %c0_2 = arith.constant 0 : index
    %3 = vector.load %arg1[%c0_1, %c0_2] : memref<8x13xf32, #tpu.memory_space<vmem>>, vector<8x13xf32>
    %c0_3 = arith.constant 0 : index
    %c0_4 = arith.constant 0 : index
    %4 = vector.load %arg3[%c0_3, %c0_4] : memref<13x32xf32, #tpu.memory_space<vmem>>, vector<13x32xf32>
    %cst_5 = arith.constant dense<0.000000e+00> : vector<8x32xf32>
    %5 = tpu.matmul %3, %4, %cst_5 {dimension_numbers = #tpu.dot_dimension_numbers<[1], [0], [0], [1], [0, 0, 1, 1], [], []>} : vector<8x13xf32>, vector<13x32xf32>, vector<8x32xf32> -> vector<8x32xf32>
    %c0_6 = arith.constant 0 : index
    %c0_7 = arith.constant 0 : index
    %6 = vector.load %arg4[%c0_6, %c0_7] : memref<4x32xf32, #tpu.memory_space<vmem>>, vector<4x32xf32>
    %cst_8 = arith.constant dense<0.000000e+00> : vector<8x32xf32>
    %7 = tpu.matmul %2, %6, %cst_8 {dimension_numbers = #tpu.dot_dimension_numbers<[1], [0], [0], [1], [0, 0, 1, 1], [], []>} : vector<8x4xf32>, vector<4x32xf32>, vector<8x32xf32> -> vector<8x32xf32>
    %8 = arith.addf %5, %7 : vector<8x32xf32>
    %c0_9 = arith.constant 0 : index
    %c0_10 = arith.constant 0 : index
    %9 = vector.load %arg5[%c0_9, %c0_10] : memref<1x32xf32, #tpu.memory_space<vmem>>, vector<1x32xf32>
    %10 = vector.broadcast %9 : vector<1x32xf32> to vector<8x32xf32>
    %11 = arith.addf %8, %10 : vector<8x32xf32>
    %cst_11 = arith.constant 0.000000e+00 : f32
    %12 = vector.broadcast %cst_11 : f32 to vector<8x32xf32>
    %13 = arith.maximumf %11, %12 : vector<8x32xf32>
    %c0_12 = arith.constant 0 : index
    %c0_13 = arith.constant 0 : index
    %14 = vector.load %arg6[%c0_12, %c0_13] : memref<32x32xf32, #tpu.memory_space<vmem>>, vector<32x32xf32>
    %cst_14 = arith.constant dense<0.000000e+00> : vector<8x32xf32>
    %15 = tpu.matmul %13, %14, %cst_14 {dimension_numbers = #tpu.dot_dimension_numbers<[1], [0], [0], [1], [0, 0, 1, 1], [], []>} : vector<8x32xf32>, vector<32x32xf32>, vector<8x32xf32> -> vector<8x32xf32>
    %c0_15 = arith.constant 0 : index
    %c0_16 = arith.constant 0 : index
    %16 = vector.load %arg7[%c0_15, %c0_16] : memref<1x32xf32, #tpu.memory_space<vmem>>, vector<1x32xf32>
    %17 = vector.broadcast %16 : vector<1x32xf32> to vector<8x32xf32>
    %18 = arith.addf %15, %17 : vector<8x32xf32>
    %cst_17 = arith.constant 0.000000e+00 : f32
    %19 = vector.broadcast %cst_17 : f32 to vector<8x32xf32>
    %20 = arith.maximumf %18, %19 : vector<8x32xf32>
    %c0_18 = arith.constant 0 : index
    %c0_19 = arith.constant 0 : index
    %21 = vector.load %arg8[%c0_18, %c0_19] : memref<1x32xf32, #tpu.memory_space<vmem>>, vector<1x32xf32>
    %22 = vector.broadcast %21 : vector<1x32xf32> to vector<8x32xf32>
    %23 = arith.mulf %20, %22 : vector<8x32xf32>
    %cst_20 = arith.constant dense<0.000000e+00> : vector<8xf32>
    %24 = vector.multi_reduction <add>, %23, %cst_20 [1] : vector<8x32xf32> to vector<8xf32>
    %25 = vector.shape_cast %24 : vector<8xf32> to vector<8x1xf32>
    %c0_21 = arith.constant 0 : index
    %c0_22 = arith.constant 0 : index
    %26 = vector.load %arg9[%c0_21, %c0_22] : memref<1x1xf32, #tpu.memory_space<vmem>>, vector<1x1xf32>
    %27 = vector.broadcast %26 : vector<1x1xf32> to vector<8x1xf32>
    %28 = arith.addf %25, %27 : vector<8x1xf32>
    %29 = vector.shape_cast %28 : vector<8x1xf32> to vector<8x1xf32>
    %30 = vector.broadcast %29 : vector<8x1xf32> to vector<8x128xf32>
    %c0_23 = arith.constant 0 : index
    %c0_24 = arith.constant 0 : index
    %31 = vector.load %arg10[%c0_23, %c0_24] : memref<8x128xf32, #tpu.memory_space<vmem>>, vector<8x128xf32>
    tpu.vector_store %arg10[%c0_23, %c0_24], %30 {strides = array<i32>} : memref<8x128xf32, #tpu.memory_space<vmem>>, vector<8x128xf32>,
    return
  }
  func.func @transform_0(%arg0: i32) -> (i32, i32) {
    %c0_i32 = arith.constant 0 : i32
    %c0_i32_0 = arith.constant 0 : i32
    return %arg0, %c0_i32 : i32, i32
  }
  func.func @transform_1(%arg0: i32) -> (i32, i32) {
    %c0_i32 = arith.constant 0 : i32
    %c0_i32_0 = arith.constant 0 : i32
    return %arg0, %c0_i32 : i32, i32
  }
  func.func @transform_2(%arg0: i32) -> (i32, i32) {
    %c0_i32 = arith.constant 0 : i32
    %c0_i32_0 = arith.constant 0 : i32
    %c0_i32_1 = arith.constant 0 : i32
    return %c0_i32, %c0_i32_0 : i32, i32
  }
  func.func @transform_3(%arg0: i32) -> (i32, i32) {
    %c0_i32 = arith.constant 0 : i32
    %c0_i32_0 = arith.constant 0 : i32
    %c0_i32_1 = arith.constant 0 : i32
    return %c0_i32, %c0_i32_0 : i32, i32
  }
  func.func @transform_4(%arg0: i32) -> (i32, i32) {
    %c0_i32 = arith.constant 0 : i32
    %c0_i32_0 = arith.constant 0 : i32
    %c0_i32_1 = arith.constant 0 : i32
    return %c0_i32, %c0_i32_0 : i32, i32
  }
  func.func @transform_5(%arg0: i32) -> (i32, i32) {
    %c0_i32 = arith.constant 0 : i32
    %c0_i32_0 = arith.constant 0 : i32
    %c0_i32_1 = arith.constant 0 : i32
    return %c0_i32, %c0_i32_0 : i32, i32
  }
  func.func @transform_6(%arg0: i32) -> (i32, i32) {
    %c0_i32 = arith.constant 0 : i32
    %c0_i32_0 = arith.constant 0 : i32
    %c0_i32_1 = arith.constant 0 : i32
    return %c0_i32, %c0_i32_0 : i32, i32
  }
  func.func @transform_7(%arg0: i32) -> (i32, i32) {
    %c0_i32 = arith.constant 0 : i32
    %c0_i32_0 = arith.constant 0 : i32
    %c0_i32_1 = arith.constant 0 : i32
    return %c0_i32, %c0_i32_0 : i32, i32
  }
  func.func @transform_8(%arg0: i32) -> (i32, i32) {
    %c0_i32 = arith.constant 0 : i32
    %c0_i32_0 = arith.constant 0 : i32
    %c0_i32_1 = arith.constant 0 : i32
    return %c0_i32, %c0_i32_0 : i32, i32
  }
  func.func @transform_9(%arg0: i32) -> (i32, i32) {
    %c0_i32 = arith.constant 0 : i32
    %c0_i32_0 = arith.constant 0 : i32
    return %arg0, %c0_i32 : i32, i32
  }
}

</mosaic_0001>

<llo_original>
// kernel: tpu_custom_call.1
$region0: #{tpu_custom_call.1}
  #allocation0 [shape = 'u32[]', space=smem, size = 0x4, offset = 0x4, fixed_abs, tag = 'smem constant byte address 0x4 - core index']
  #allocation1 [shape = 'u32[144,128]{1,0:T(1,128)}', space=vmem, size = 0x12000, scoped, tag = 'internal scratch']
  #allocation2 [shape = 'f32[1,1]{1,0:T(1,128)S(1)}', space=vmem, size = 0x200, scoped, tag = 'scoped memory for tpu_custom_call.1']
  %s0 = inlined_call_operand.hbm [shape: f32[8,13], index: 0, kind: input, shape index: {}]
  %s1 = inlined_call_operand.vmem [shape: f32[8,4], index: 1, kind: input, shape index: {}]
  %s2 = inlined_call_operand.vmem [shape: f32[13,32], index: 2, kind: input, shape index: {}]
  %s3 = inlined_call_operand.hbm [shape: f32[4,32], index: 3, kind: input, shape index: {}]
  %s4 = inlined_call_operand.vmem [shape: f32[1,32], index: 4, kind: input, shape index: {}]
  %s5 = inlined_call_operand.hbm [shape: f32[32,32], index: 5, kind: input, shape index: {}]
  %s6 = inlined_call_operand.vmem [shape: f32[1,32], index: 6, kind: input, shape index: {}]
  %s7 = inlined_call_operand.vmem [shape: f32[1,32], index: 7, kind: input, shape index: {}]
  %s8 = inlined_call_operand.<no memory space> [shape: f32[1,1], index: 8, kind: input, shape index: {}]
  %s9 = inlined_call_operand.hbm [shape: f32[8,128], index: 9, kind: output, shape index: {}]
  %s10 = sld [smem:[#allocation0]]
  $region58: #{tpu_custom_call.1} parent=0
    _
  %s12 = ssub.s32 1, %s10
  %s13 = scalar_select 0, %s12, %s10
  %v14 = vstv %s8
  %15 = vst [vmem:[#allocation2] sm:$0x1] %v14
  $region1: #{tpu_custom_call.1} parent=0
    #allocation3 [shape = 'u8[4096]{0}', space=vmem, size = 0x1000, scoped, tag = 'input window, operand 0, single buffered']
    #allocation4 [shape = 's32[1]{0}', space=sflag, size = 0x4, scoped, tag = 'scoped memory for tpu_custom_call.1']
    #allocation5 [shape = 's32[1]{0}', space=sflag, size = 0x4, scoped, tag = 'scoped memory for tpu_custom_call.1']
    #allocation6 [shape = 'u8[2048]{0}', space=vmem, size = 0x800, scoped, tag = 'input window, operand 3, single buffered']
    #allocation7 [shape = 's32[1]{0}', space=sflag, size = 0x4, scoped, tag = 'scoped memory for tpu_custom_call.1']
    #allocation8 [shape = 'u8[16384]{0}', space=vmem, size = 0x4000, scoped, tag = 'input window, operand 5, single buffered']
    #allocation9 [shape = 'u8[4096]{0}', space=vmem, size = 0x1000, scoped, tag = 'output window, operand 0, single buffered']
    %16 = vsyncpa [#allocation4], 0
    %17 = vsyncpa [#allocation7], 0
    %18 = vsyncpa [#allocation5], 0
    // Predicated region
    $region2: #{tpu_custom_call.1} parent=1 // pred_check
      _
    $region3: #{tpu_custom_call.1} parent=1 // pred_check_branch
      %20 = sbr.rel (0) target = $region5
    $region4: #{tpu_custom_call.1} parent=1 // pred_region
      %s22 = ssub.s32 128, 128
      %23 = vsyncadd [#allocation4], %s22
      %s25 = sshll.u32 [#allocation3], 4
      %s26 = int_to_ptr.vmem [resolvable:$true] %s25
      %28 = dma.hbm_to_vmem [thread:$0]  %s0, 128, %s26, [#allocation4]
    $region5: #{tpu_custom_call.1} parent=1 // pred_fallthru
      _
    // Predicated region
    $region6: #{tpu_custom_call.1} parent=1 // pred_check
      _
    $region7: #{tpu_custom_call.1} parent=1 // pred_check_branch
      %30 = sbr.rel (0) target = $region9
    $region8: #{tpu_custom_call.1} parent=1 // pred_region
      _
    $region9: #{tpu_custom_call.1} parent=1 // pred_fallthru
      _
    // Predicated region
    $region10: #{tpu_custom_call.1} parent=1 // pred_check
      _
    $region11: #{tpu_custom_call.1} parent=1 // pred_check_branch
      %32 = sbr.rel (0) target = $region13
    $region12: #{tpu_custom_call.1} parent=1 // pred_region
      _
    $region13: #{tpu_custom_call.1} parent=1 // pred_fallthru
      _
    // Predicated region
    $region14: #{tpu_custom_call.1} parent=1 // pred_check
      _
    $region15: #{tpu_custom_call.1} parent=1 // pred_check_branch
      %34 = sbr.rel (0) target = $region17
    $region16: #{tpu_custom_call.1} parent=1 // pred_region
      %s36 = ssub.s32 64, 64
      %37 = vsyncadd [#allocation7], %s36
      %s39 = sshll.u32 [#allocation6], 4
      %s40 = int_to_ptr.vmem [resolvable:$true] %s39
      %42 = dma.hbm_to_vmem [thread:$0]  %s3, 64, %s40, [#allocation7]
    $region17: #{tpu_custom_call.1} parent=1 // pred_fallthru
      _
    // Predicated region
    $region18: #{tpu_custom_call.1} parent=1 // pred_check
      _
    $region19: #{tpu_custom_call.1} parent=1 // pred_check_branch
      %44 = sbr.rel (0) target = $region21
    $region20: #{tpu_custom_call.1} parent=1 // pred_region
      _
    $region21: #{tpu_custom_call.1} parent=1 // pred_fallthru
      _
    // Predicated region
    $region22: #{tpu_custom_call.1} parent=1 // pred_check
      _
    $region23: #{tpu_custom_call.1} parent=1 // pred_check_branch
      %46 = sbr.rel (0) target = $region25
    $region24: #{tpu_custom_call.1} parent=1 // pred_region
      %s48 = ssub.s32 512, 512
      %49 = vsyncadd [#allocation7], %s48
      %s50 = sshll.u32 [#allocation8], 4
      %s51 = int_to_ptr.vmem [resolvable:$true] %s50
      %56 = dma.hbm_to_vmem [thread:$0]  %s5, 512, %s51, [#allocation7], 128, 128, 8
    $region25: #{tpu_custom_call.1} parent=1 // pred_fallthru
      _
    // Predicated region
    $region26: #{tpu_custom_call.1} parent=1 // pred_check
      _
    $region27: #{tpu_custom_call.1} parent=1 // pred_check_branch
      %58 = sbr.rel (0) target = $region29
    $region28: #{tpu_custom_call.1} parent=1 // pred_region
      _
    $region29: #{tpu_custom_call.1} parent=1 // pred_fallthru
      _
    // Predicated region
    $region30: #{tpu_custom_call.1} parent=1 // pred_check
      _
    $region31: #{tpu_custom_call.1} parent=1 // pred_check_branch
      %60 = sbr.rel (0) target = $region33
    $region32: #{tpu_custom_call.1} parent=1 // pred_region
      _
    $region33: #{tpu_custom_call.1} parent=1 // pred_fallthru
      _
    // Predicated region
    $region34: #{tpu_custom_call.1} parent=1 // pred_check
      _
    $region35: #{tpu_custom_call.1} parent=1 // pred_check_branch
      %62 = sbr.rel (0) target = $region37
    $region36: #{tpu_custom_call.1} parent=1 // pred_region
      _
    $region37: #{tpu_custom_call.1} parent=1 // pred_fallthru
      _
    // Predicated region
    $region38: #{tpu_custom_call.1} parent=1 // pred_check
      _
    $region39: #{tpu_custom_call.1} parent=1 // pred_check_branch
      %64 = sbr.rel (0) target = $region41
    $region40: #{tpu_custom_call.1} parent=1 // pred_region
      %65 = dma.done [#allocation4], 128
    $region41: #{tpu_custom_call.1} parent=1 // pred_fallthru
      _
    // Predicated region
    $region42: #{tpu_custom_call.1} parent=1 // pred_check
      _
    $region43: #{tpu_custom_call.1} parent=1 // pred_check_branch
      %67 = sbr.rel (0) target = $region45
    $region44: #{tpu_custom_call.1} parent=1 // pred_region
      %68 = dma.done [#allocation7], 64
    $region45: #{tpu_custom_call.1} parent=1 // pred_fallthru
      _
    // Predicated region
    $region46: #{tpu_custom_call.1} parent=1 // pred_check
      _
    $region47: #{tpu_custom_call.1} parent=1 // pred_check_branch
      %70 = sbr.rel (0) target = $region49
    $region48: #{tpu_custom_call.1} parent=1 // pred_region
      %71 = dma.done [#allocation7], 512
    $region49: #{tpu_custom_call.1} parent=1 // pred_fallthru
      _
    %v72 = vld [vmem:[%s1] sm:$0xff]
    %v73 = vmul.f32 %v72, 0.5
    %v74 = vld [vmem:[#allocation3] sm:$0xff]
    %v75 = vld [vmem:[%s2] sm:$0xff]
    %v76 = vld [vmem:[%s2 + $0x8] sm:$0x1f]
    %v77 = vld [vmem:[#allocation6] sm:$0xf]
    %vm78 = vcmask 31744
    %v80 = vsel %vm78, %v73, 0
    %vm82 = vcmask 1043456
    %v84 = vsel %vm82, %v77, 0
    %86 = vmatprep.subr.mxu0 0.0
    %87 = vmatpush1.msra.mxu0 0.0
    %88 = vmatprep.subr.mxu0 0.0
    %89 = vmatpush1.msra.mxu0 0.0
    %90 = vmatprep.subr.mxu0 0.0
    %91 = vmatpush1.msra.mxu0 0.0
    %92 = vmatprep.subr.mxu0 0.0
    %93 = vmatpush1.msra.mxu0 0.0
    %94 = vmatprep.subr.mxu0 0.0
    %95 = vmatpush1.msra.mxu0 0.0
    %96 = vmatprep.subr.mxu0 0.0
    %97 = vmatpush1.msra.mxu0 0.0
    %98 = vmatprep.subr.mxu0 0.0
    %99 = vmatpush1.msra.mxu0 0.0
    %100 = vmatprep.subr.mxu0 0.0
    %101 = vmatpush1.msra.mxu0 0.0
    %102 = vmatprep.subr.mxu0 0.0
    %103 = vmatpush1.msra.mxu0 0.0
    %104 = vmatprep.subr.mxu0 0.0
    %105 = vmatpush1.msra.mxu0 0.0
    %106 = vmatprep.subr.mxu0 0.0
    %107 = vmatpush1.msra.mxu0 0.0
    %108 = vmatprep.subr.mxu0 0.0
    %109 = vmatpush1.msra.mxu0 0.0
    %110 = vmatprep.subr.mxu0 0.0
    %111 = vmatpush1.msra.mxu0 0.0
    %112 = vmatprep.subr.mxu0 0.0
    %113 = vmatpush1.msra.mxu0 0.0
    %114 = vmatprep.subr.mxu0 0.0
    %115 = vmatpush1.msra.mxu0 0.0
    %116 = vmatprep.subr.mxu0 0.0
    %117 = vmatpush1.msra.mxu0 %v84
    %118 = vmatprep.subr.mxu0 0.0
    %119 = vmatpush2.msra.mxu0 0.0
    %120 = vmatprep.subr.mxu0 0.0
    %121 = vmatpush2.msra.mxu0 0.0
    %122 = vmatprep.subr.mxu0 0.0
    %123 = vmatpush2.msra.mxu0 0.0
    %124 = vmatprep.subr.mxu0 0.0
    %125 = vmatpush2.msra.mxu0 0.0
    %126 = vmatprep.subr.mxu0 0.0
    %127 = vmatpush2.msra.mxu0 0.0
    %128 = vmatprep.subr.mxu0 0.0
    %129 = vmatpush2.msra.mxu0 0.0
    %130 = vmatprep.subr.mxu0 0.0
    %131 = vmatpush2.msra.mxu0 0.0
    %132 = vmatprep.subr.mxu0 0.0
    %133 = vmatpush2.msra.mxu0 0.0
    %134 = vmatprep.subr.mxu0 0.0
    %135 = vmatpush2.msra.mxu0 0.0
    %136 = vmatprep.subr.mxu0 0.0
    %137 = vmatpush2.msra.mxu0 0.0
    %138 = vmatprep.subr.mxu0 0.0
    %139 = vmatpush2.msra.mxu0 0.0
    %140 = vmatprep.subr.mxu0 0.0
    %141 = vmatpush2.msra.mxu0 0.0
    %142 = vmatprep.subr.mxu0 0.0
    %143 = vmatpush2.msra.mxu0 0.0
    %144 = vmatprep.subr.mxu0 0.0
    %145 = vmatpush2.msra.mxu0 0.0
    %146 = vmatprep.subr.mxu0 0.0
    %147 = vmatpush2.msra.mxu0 0.0
    %148 = vmatprep.subr.mxu0 0.0
    %149 = vmatpush2.msra.mxu0 0.0
    %150 = vmatprep.mubr.f32.mxu0 0.0
    %151 = vmatmul.mubr.f32.gmra.mxu0 %v80
    %v152 = vpop.f32.mrf.mxu0
    %v153 = vadd.f32 0.0, %v152
    %v154 = vpop.f32.mrf.mxu0
    %155 = vdwg.mxu0
    %vm156 = vcmask 105472
    %v158 = vsel %vm156, %v74, 0
    %vm160 = vcmask 1044480
    %v162 = vsel %vm160, %v76, 0
    %164 = vmatprep.subr.mxu0 0.0
    %165 = vmatpush1.msra.mxu0 0.0
    %166 = vmatprep.subr.mxu0 0.0
    %167 = vmatpush1.msra.mxu0 0.0
    %168 = vmatprep.subr.mxu0 0.0
    %169 = vmatpush1.msra.mxu0 0.0
    %170 = vmatprep.subr.mxu0 0.0
    %171 = vmatpush1.msra.mxu0 0.0
    %172 = vmatprep.subr.mxu0 0.0
    %173 = vmatpush1.msra.mxu0 0.0
    %174 = vmatprep.subr.mxu0 0.0
    %175 = vmatpush1.msra.mxu0 0.0
    %176 = vmatprep.subr.mxu0 0.0
    %177 = vmatpush1.msra.mxu0 0.0
    %178 = vmatprep.subr.mxu0 0.0
    %179 = vmatpush1.msra.mxu0 0.0
    %180 = vmatprep.subr.mxu0 0.0
    %181 = vmatpush1.msra.mxu0 0.0
    %182 = vmatprep.subr.mxu0 0.0
    %183 = vmatpush1.msra.mxu0 0.0
    %184 = vmatprep.subr.mxu0 0.0
    %185 = vmatpush1.msra.mxu0 0.0
    %186 = vmatprep.subr.mxu0 0.0
    %187 = vmatpush1.msra.mxu0 0.0
    %188 = vmatprep.subr.mxu0 0.0
    %189 = vmatpush1.msra.mxu0 0.0
    %190 = vmatprep.subr.mxu0 0.0
    %191 = vmatpush1.msra.mxu0 0.0
    %192 = vmatprep.subr.mxu0 0.0
    %193 = vmatpush1.msra.mxu0 %v162
    %194 = vmatprep.subr.mxu0 0.0
    %195 = vmatpush1.msra.mxu0 %v75
    %196 = vmatprep.subr.mxu0 0.0
    %197 = vmatpush2.msra.mxu0 0.0
    %198 = vmatprep.subr.mxu0 0.0
    %199 = vmatpush2.msra.mxu0 0.0
    %200 = vmatprep.subr.mxu0 0.0
    %201 = vmatpush2.msra.mxu0 0.0
    %202 = vmatprep.subr.mxu0 0.0
    %203 = vmatpush2.msra.mxu0 0.0
    %204 = vmatprep.subr.mxu0 0.0
    %205 = vmatpush2.msra.mxu0 0.0
    %206 = vmatprep.subr.mxu0 0.0
    %207 = vmatpush2.msra.mxu0 0.0
    %208 = vmatprep.subr.mxu0 0.0
    %209 = vmatpush2.msra.mxu0 0.0
    %210 = vmatprep.subr.mxu0 0.0
    %211 = vmatpush2.msra.mxu0 0.0
    %212 = vmatprep.subr.mxu0 0.0
    %213 = vmatpush2.msra.mxu0 0.0
    %214 = vmatprep.subr.mxu0 0.0
    %215 = vmatpush2.msra.mxu0 0.0
    %216 = vmatprep.subr.mxu0 0.0
    %217 = vmatpush2.msra.mxu0 0.0
    %218 = vmatprep.subr.mxu0 0.0
    %219 = vmatpush2.msra.mxu0 0.0
    %220 = vmatprep.subr.mxu0 0.0
    %221 = vmatpush2.msra.mxu0 0.0
    %222 = vmatprep.subr.mxu0 0.0
    %223 = vmatpush2.msra.mxu0 0.0
    %224 = vmatprep.subr.mxu0 0.0
    %225 = vmatpush2.msra.mxu0 0.0
    %226 = vmatprep.subr.mxu0 0.0
    %227 = vmatpush2.msra.mxu0 0.0
    %228 = vmatprep.mubr.f32.mxu0 0.0
    %229 = vmatmul.mubr.f32.gmra.mxu0 %v158
    %v230 = vpop.f32.mrf.mxu0
    %v231 = vadd.f32 %v153, %v230
    %v232 = vpop.f32.mrf.mxu0
    %233 = vdwg.mxu0
    %v234 = vld [vmem:[%s4] sm:$0x1]
    %v236 = vlaneseq
    %v237 = vshrl.u32 %v236, 7
    %v238 = vsub.s32 0, %v237
    %v239 = vrot.slane %v234, %v238
    %v241 = vadd.f32 %v231, %v239
    %v242 = vmax.f32 %v241, 0.0
    %v243 = vld [vmem:[#allocation8] sm:$0xff]
    %v244 = vld [vmem:[#allocation8 + $0x8] sm:$0xff]
    %v245 = vld [vmem:[#allocation8 + $0x10] sm:$0xff]
    %v246 = vld [vmem:[#allocation8 + $0x18] sm:$0xff]
    %v247 = vld [vmem:[%s6] sm:$0x1]
    %v249 = vlaneseq
    %v250 = vshrl.u32 %v249, 7
    %v251 = vsub.s32 0, %v250
    %v252 = vrot.slane %v247, %v251
    %vm254 = vcmask 261120
    %v256 = vsel %vm254, %v242, 0
    %258 = vmatprep.subr.mxu0 0.0
    %259 = vmatpush1.msra.mxu0 0.0
    %260 = vmatprep.subr.mxu0 0.0
    %261 = vmatpush1.msra.mxu0 0.0
    %262 = vmatprep.subr.mxu0 0.0
    %263 = vmatpush1.msra.mxu0 0.0
    %264 = vmatprep.subr.mxu0 0.0
    %265 = vmatpush1.msra.mxu0 0.0
    %266 = vmatprep.subr.mxu0 0.0
    %267 = vmatpush1.msra.mxu0 0.0
    %268 = vmatprep.subr.mxu0 0.0
    %269 = vmatpush1.msra.mxu0 0.0
    %270 = vmatprep.subr.mxu0 0.0
    %271 = vmatpush1.msra.mxu0 0.0
    %272 = vmatprep.subr.mxu0 0.0
    %273 = vmatpush1.msra.mxu0 0.0
    %274 = vmatprep.subr.mxu0 0.0
    %275 = vmatpush1.msra.mxu0 0.0
    %276 = vmatprep.subr.mxu0 0.0
    %277 = vmatpush1.msra.mxu0 0.0
    %278 = vmatprep.subr.mxu0 0.0
    %279 = vmatpush1.msra.mxu0 0.0
    %280 = vmatprep.subr.mxu0 0.0
    %281 = vmatpush1.msra.mxu0 0.0
    %282 = vmatprep.subr.mxu0 0.0
    %283 = vmatpush1.msra.mxu0 %v246
    %284 = vmatprep.subr.mxu0 0.0
    %285 = vmatpush1.msra.mxu0 %v245
    %286 = vmatprep.subr.mxu0 0.0
    %287 = vmatpush1.msra.mxu0 %v244
    %288 = vmatprep.subr.mxu0 0.0
    %289 = vmatpush1.msra.mxu0 %v243
    %290 = vmatprep.subr.mxu0 0.0
    %291 = vmatpush2.msra.mxu0 0.0
    %292 = vmatprep.subr.mxu0 0.0
    %293 = vmatpush2.msra.mxu0 0.0
    %294 = vmatprep.subr.mxu0 0.0
    %295 = vmatpush2.msra.mxu0 0.0
    %296 = vmatprep.subr.mxu0 0.0
    %297 = vmatpush2.msra.mxu0 0.0
    %298 = vmatprep.subr.mxu0 0.0
    %299 = vmatpush2.msra.mxu0 0.0
    %300 = vmatprep.subr.mxu0 0.0
    %301 = vmatpush2.msra.mxu0 0.0
    %302 = vmatprep.subr.mxu0 0.0
    %303 = vmatpush2.msra.mxu0 0.0
    %304 = vmatprep.subr.mxu0 0.0
    %305 = vmatpush2.msra.mxu0 0.0
    %306 = vmatprep.subr.mxu0 0.0
    %307 = vmatpush2.msra.mxu0 0.0
    %308 = vmatprep.subr.mxu0 0.0
    %309 = vmatpush2.msra.mxu0 0.0
    %310 = vmatprep.subr.mxu0 0.0
    %311 = vmatpush2.msra.mxu0 0.0
    %312 = vmatprep.subr.mxu0 0.0
    %313 = vmatpush2.msra.mxu0 0.0
    %314 = vmatprep.subr.mxu0 0.0
    %315 = vmatpush2.msra.mxu0 0.0
    %316 = vmatprep.subr.mxu0 0.0
    %317 = vmatpush2.msra.mxu0 0.0
    %318 = vmatprep.subr.mxu0 0.0
    %319 = vmatpush2.msra.mxu0 0.0
    %320 = vmatprep.subr.mxu0 0.0
    %321 = vmatpush2.msra.mxu0 0.0
    %322 = vmatprep.mubr.f32.mxu0 0.0
    %323 = vmatmul.mubr.f32.gmra.mxu0 %v256
    %v324 = vpop.f32.mrf.mxu0
    %v325 = vadd.f32 %v252, %v324
    %v326 = vpop.f32.mrf.mxu0
    %327 = vdwg.mxu0
    %v328 = vmax.f32 %v325, 0.0
    %v329 = vld [vmem:[%s7] sm:$0x1]
    %v331 = vlaneseq
    %v332 = vshrl.u32 %v331, 7
    %v333 = vsub.s32 0, %v332
    %v334 = vrot.slane %v329, %v333
    %v336 = vmul.f32 %v328, %v334
    %v337 = vsel %vm254, %v336, 0.0
    %338 = vadd.xlane.f32.xlu0 %v337
    %v339 = vpop.xlane.xlu0 %338
    %v340 = vld [vmem:[#allocation2] sm:$0x1]
    %v342 = vlaneseq
    %v343 = vshrl.u32 %v342, 7
    %v344 = vsub.s32 0, %v343
    %v345 = vrot.slane %v340, %v344
    %v347 = vadd.f32 %v339, %v345
    %349 = vset.pattern.permute.xlu0 0
    %350 = vperm.xlu0 %349, %v347
    %v351 = vpop.permute.xlu0 %350
    %353 = vst [vmem:[#allocation9] sm:$0xff] %v351
    // Predicated region
    $region50: #{tpu_custom_call.1} parent=1 // pred_check
      _
    $region51: #{tpu_custom_call.1} parent=1 // pred_check_branch
      %355 = sbr.rel (0) target = $region53
    $region52: #{tpu_custom_call.1} parent=1 // pred_region
      %s357 = ssub.s32 128, 128
      %358 = vsyncadd [#allocation5], %s357
      %s360 = sshll.u32 [#allocation9], 4
      %s361 = int_to_ptr.vmem [resolvable:$true] %s360
      %363 = dma.vmem_to_hbm [thread:$0]  %s361, 128, %s9, [#allocation5]
    $region53: #{tpu_custom_call.1} parent=1 // pred_fallthru
      _
    // Predicated region
    $region54: #{tpu_custom_call.1} parent=1 // pred_check
      _
    $region55: #{tpu_custom_call.1} parent=1 // pred_check_branch
      %365 = sbr.rel (0) target = $region57
    $region56: #{tpu_custom_call.1} parent=1 // pred_region
      %366 = dma.done [#allocation5], 128
    $region57: #{tpu_custom_call.1} parent=1 // pred_fallthru
      _
    %367 = vsyncpa [#allocation4], 1
    %368 = vsyncpa [#allocation7], 1
    %369 = vsyncpa [#allocation5], 1

</llo_original>
